<compile_context>
chip_gen: v6e
topology: v6e:2x2x1
jax: 0.10.0
libtpu: 0.0.40
codegen_flags: <defaults>
</compile_context>

<pallas_src>
import functools

import jax
import jax.numpy as jnp
from jax import lax
from jax.experimental import pallas as pl
from jax.experimental.pallas import tpu as pltpu

BN_EPS = 1e-5
LANE = 128
SUBLANE = 8


def _round_up(n, m):
    return ((n + m - 1) // m) * m


def _pad_axis(a, axis, target):
    pad = target - a.shape[axis]
    if pad <= 0:
        return a
    widths = [(0, 0)] * a.ndim
    widths[axis] = (0, pad)
    return jnp.pad(a, widths)


def dense_block_kernel(x_ref, w1_ref, gamma_ref, beta_ref, w2_ref, b2_ref,
                       o_ref, sum_ref, sumsq_ref, scale_ref, shift_ref,
                       *, inv_n):
    phase = pl.program_id(0)   # 0: accumulate BN stats, 1: apply BN+ReLU+Linear2
    tile = pl.program_id(1)    # batch tile index

    # Linear 1 on the MXU: bf16 inputs, f32 accumulate.  b1 is omitted because
    # train-mode BatchNorm subtracts the batch mean, which cancels it exactly.
    h = jnp.dot(x_ref[...].astype(jnp.bfloat16), w1_ref[...],
                preferred_element_type=jnp.float32)           # (tile_b, hid_p) f32

    @pl.when(phase == 0)
    def _stats():
        @pl.when(tile == 0)
        def _init():
            sum_ref[...] = jnp.zeros_like(sum_ref)
            sumsq_ref[...] = jnp.zeros_like(sumsq_ref)
        sum_ref[...] += jnp.sum(h, axis=0, keepdims=True)
        sumsq_ref[...] += jnp.sum(h * h, axis=0, keepdims=True)

    @pl.when(phase == 1)
    def _apply():
        @pl.when(tile == 0)
        def _fold():
            mean = sum_ref[...] * inv_n
            var = sumsq_ref[...] * inv_n - mean * mean
            scale = gamma_ref[...] * lax.rsqrt(var + BN_EPS)
            scale_ref[...] = scale
            shift_ref[...] = beta_ref[...] - mean * scale
        # Folded BN (one FMA) + ReLU, all in f32 on the VPU.
        hb = jnp.maximum(h * scale_ref[...] + shift_ref[...], 0.0)
        out = jnp.dot(hb.astype(jnp.bfloat16), w2_ref[...],
                      preferred_element_type=jnp.float32) + b2_ref[...]
        o_ref[...] = out.astype(o_ref.dtype)


def dense_block(x, w1, b1, gamma, beta, w2, b2, *, tile_b=512):
    """DenseBlock forward.  Weights are pre-transposed as (in, out)."""
    B, in_dim = x.shape
    hid = w1.shape[1]
    out_dim = w2.shape[1]
    del b1  # cancelled exactly by train-mode BatchNorm mean subtraction

    hid_p = _round_up(hid, LANE)
    out_p = _round_up(out_dim, LANE)

    tile_b = _round_up(min(tile_b, _round_up(B, SUBLANE)), SUBLANE)
    b_p = _round_up(B, tile_b)
    nb = b_p // tile_b

    # Zero-padded rows/cols are inert: zero x rows give h == 0 (no bias), so
    # they contribute nothing to the BN sums; zero W2 rows/cols keep padded
    # hidden/output features at zero.  BN stats divide by the real batch B.
    x_p = _pad_axis(x, 0, b_p)
    w1_p = _pad_axis(w1, 1, hid_p).astype(jnp.bfloat16)
    w2_p = _pad_axis(_pad_axis(w2, 0, hid_p), 1, out_p).astype(jnp.bfloat16)
    gamma_p = _pad_axis(gamma.reshape(1, hid).astype(jnp.float32), 1, hid_p)
    beta_p = _pad_axis(beta.reshape(1, hid).astype(jnp.float32), 1, hid_p)
    b2_p = _pad_axis(b2.reshape(1, out_dim).astype(jnp.float32), 1, out_p)

    kernel = functools.partial(dense_block_kernel, inv_n=1.0 / B)

    grid = (2, nb)  # (phase, batch tile); both sequential ("arbitrary")
    # TODO(synk): on v7x, shard the batch-tile axis across the 2 TensorCores
    # and exchange partial BN sums via VMEM_SHARED/CMEM + core_barrier.

    in_specs = [
        pl.BlockSpec((tile_b, in_dim), lambda p, i: (i, 0)),   # x (re-read per phase)
        pl.BlockSpec((in_dim, hid_p), lambda p, i: (0, 0)),    # W1 (resident, bf16)
        pl.BlockSpec((1, hid_p), lambda p, i: (0, 0)),         # gamma
        pl.BlockSpec((1, hid_p), lambda p, i: (0, 0)),         # beta
        pl.BlockSpec((hid_p, out_p), lambda p, i: (0, 0)),     # W2 (resident, bf16)
        pl.BlockSpec((1, out_p), lambda p, i: (0, 0)),         # b2
    ]
    # Output block index is frozen at 0 during phase 0 (nothing is written,
    # so no stale write-backs hit HBM); in phase 1 it tracks the batch tile.
    out_specs = pl.BlockSpec((tile_b, out_p), lambda p, i: (p * i, 0))

    # VMEM budget: double-buffered x/out tiles + resident bf16 weights + scratch.
    needed = (2 * tile_b * in_dim * 4 + 2 * tile_b * out_p * 4
              + w1_p.size * 2 + w2_p.size * 2
              + (2 * hid_p + out_p) * 4 + 4 * hid_p * 4)
    vmem_limit = int(min(max(2 * needed, 16 * 2**20), 48 * 2**20))

    flops = 2 * b_p * in_dim * hid_p * 2 + 2 * b_p * hid_p * out_p
    bytes_accessed = (2 * x_p.size * 4 + w1_p.size * 2 + w2_p.size * 2
                      + (2 * hid_p + out_p) * 4 + b_p * out_p * 4)

    out = pl.pallas_call(
        kernel,
        out_shape=jax.ShapeDtypeStruct((b_p, out_p), x.dtype),
        grid_spec=pltpu.PrefetchScalarGridSpec(
            num_scalar_prefetch=0,
            grid=grid,
            in_specs=in_specs,
            out_specs=out_specs,
            scratch_shapes=[pltpu.VMEM((1, hid_p), jnp.float32)] * 4,
        ),
        compiler_params=pltpu.CompilerParams(
            dimension_semantics=("arbitrary", "arbitrary"),
            vmem_limit_bytes=vmem_limit,
        ),
        cost_estimate=pl.CostEstimate(
            flops=int(flops),
            transcendentals=int(hid_p),
            bytes_accessed=int(bytes_accessed)),
    )(x_p, w1_p, gamma_p, beta_p, w2_p, b2_p)

    return out[:B, :out_dim]


def reference(x, w1, b1, gamma, beta, w2, b2):
    h = x @ w1 + b1
    mean = jnp.mean(h, axis=0, keepdims=True)
    var = jnp.mean((h - mean) ** 2, axis=0, keepdims=True)
    h = (h - mean) / jnp.sqrt(var + BN_EPS)
    h = h * gamma + beta
    h = jnp.maximum(h, 0.0)
    return h @ w2 + b2


if __name__ == "__main__":
    B, input_dim, hidden_dim, output_dim = 64, 32, 64, 16

    key = jax.random.PRNGKey(0)
    kx, k1, kb1, k2, kb2 = jax.random.split(key, 5)

    x = jax.random.normal(kx, (B, input_dim), dtype=jnp.float32)

    # PyTorch-style uniform init; weights stored pre-transposed as (in, out).
    bound1 = 1.0 / (input_dim ** 0.5)
    w1 = jax.random.uniform(k1, (input_dim, hidden_dim), jnp.float32,
                            -bound1, bound1)
    b1 = jax.random.uniform(kb1, (hidden_dim,), jnp.float32, -bound1, bound1)

    gamma = jnp.ones((hidden_dim,), jnp.float32)   # BatchNorm1d weight
    beta = jnp.zeros((hidden_dim,), jnp.float32)   # BatchNorm1d bias
    # TODO(synk): BatchNorm1d running_mean/var buffer updates are a training
    # side-effect and not part of the forward output; not implemented.

    bound2 = 1.0 / (hidden_dim ** 0.5)
    w2 = jax.random.uniform(k2, (hidden_dim, output_dim), jnp.float32,
                            -bound2, bound2)
    b2 = jax.random.uniform(kb2, (output_dim,), jnp.float32, -bound2, bound2)

    out = dense_block(x, w1, b1, gamma, beta, w2, b2, tile_b=32)
    out = jax.block_until_ready(out)

    ref = reference(x, w1, b1, gamma, beta, w2, b2)
    assert out.shape == (B, output_dim)
    # bf16 MXU inputs (f32 accumulation) -> bf16-appropriate tolerance.
    assert jnp.allclose(out, ref, atol=2e-2, rtol=2e-2), "mismatch vs reference"

    print("KERNEL_OK")
</pallas_src>

<mosaic_0001>
module attributes {stable_mosaic.version = 11 : i64} {
  func.func @dense_block_kernel(%arg0: i32, %arg1: i32, %arg2: memref<32x32xf32, #tpu.memory_space<vmem>>, %arg3: memref<32x128xbf16, #tpu.memory_space<vmem>>, %arg4: memref<1x128xf32, #tpu.memory_space<vmem>>, %arg5: memref<1x128xf32, #tpu.memory_space<vmem>>, %arg6: memref<128x128xbf16, #tpu.memory_space<vmem>>, %arg7: memref<1x128xf32, #tpu.memory_space<vmem>>, %arg8: memref<32x128xf32, #tpu.memory_space<vmem>>, %arg9: memref<1x128xf32, #tpu.memory_space<vmem>>, %arg10: memref<1x128xf32, #tpu.memory_space<vmem>>, %arg11: memref<1x128xf32, #tpu.memory_space<vmem>>, %arg12: memref<1x128xf32, #tpu.memory_space<vmem>>) attributes {dimension_semantics = [#tpu.dimension_semantics<arbitrary>, #tpu.dimension_semantics<arbitrary>], iteration_bounds = array<i64: 2, 2>, scalar_prefetch = 0 : i64, scratch_operands = 4 : i64, tpu.core_type = #tpu.core_type<tc>, window_params = [{transform_indices = @transform_0, window_bounds = array<i64: 32, 32>}, {pipeline_mode = #tpu.pipeline_mode<synchronous>, transform_indices = @transform_1, window_bounds = array<i64: 32, 128>}, {pipeline_mode = #tpu.pipeline_mode<synchronous>, transform_indices = @transform_2, window_bounds = array<i64: 1, 128>}, {pipeline_mode = #tpu.pipeline_mode<synchronous>, transform_indices = @transform_3, window_bounds = array<i64: 1, 128>}, {pipeline_mode = #tpu.pipeline_mode<synchronous>, transform_indices = @transform_4, window_bounds = array<i64: 128, 128>}, {pipeline_mode = #tpu.pipeline_mode<synchronous>, transform_indices = @transform_5, window_bounds = array<i64: 1, 128>}, {transform_indices = @transform_6, window_bounds = array<i64: 32, 128>}]} {
    %c0 = arith.constant 0 : index
    %c0_0 = arith.constant 0 : index
    %0 = vector.load %arg2[%c0, %c0_0] : memref<32x32xf32, #tpu.memory_space<vmem>>, vector<32x32xf32>
    %1 = arith.truncf %0 : vector<32x32xf32> to vector<32x32xbf16>
    %c0_1 = arith.constant 0 : index
    %c0_2 = arith.constant 0 : index
    %2 = vector.load %arg3[%c0_1, %c0_2] : memref<32x128xbf16, #tpu.memory_space<vmem>>, vector<32x128xbf16>
    %cst = arith.constant dense<0.000000e+00> : vector<32x128xf32>
    %3 = tpu.matmul %1, %2, %cst {dimension_numbers = #tpu.dot_dimension_numbers<[1], [0], [0], [1], [0, 0, 1, 1], [], []>} : vector<32x32xbf16>, vector<32x128xbf16>, vector<32x128xf32> -> vector<32x128xf32>
    %c0_i32 = arith.constant 0 : i32
    %4 = arith.cmpi eq, %arg0, %c0_i32 : i32
    %5 = arith.extui %4 : i1 to i32
    %c0_i32_3 = arith.constant 0 : i32
    %6 = arith.cmpi ne, %5, %c0_i32_3 : i32
    scf.if %6 {
      %c0_i32_5 = arith.constant 0 : i32
      %10 = arith.cmpi eq, %arg1, %c0_i32_5 : i32
      %11 = arith.extui %10 : i1 to i32
      %c0_i32_6 = arith.constant 0 : i32
      %12 = arith.cmpi ne, %11, %c0_i32_6 : i32
      scf.if %12 {
        %cst_17 = arith.constant 0.000000e+00 : f32
        %24 = vector.broadcast %cst_17 : f32 to vector<1x128xf32>
        %c0_18 = arith.constant 0 : index
        %c0_19 = arith.constant 0 : index
        %25 = vector.load %arg9[%c0_18, %c0_19] : memref<1x128xf32, #tpu.memory_space<vmem>>, vector<1x128xf32>
        tpu.vector_store %arg9[%c0_18, %c0_19], %24 {strides = array<i32>} : memref<1x128xf32, #tpu.memory_space<vmem>>, vector<1x128xf32>,
        %cst_20 = arith.constant 0.000000e+00 : f32
        %26 = vector.broadcast %cst_20 : f32 to vector<1x128xf32>
        %c0_21 = arith.constant 0 : index
        %c0_22 = arith.constant 0 : index
        %27 = vector.load %arg10[%c0_21, %c0_22] : memref<1x128xf32, #tpu.memory_space<vmem>>, vector<1x128xf32>
        tpu.vector_store %arg10[%c0_21, %c0_22], %26 {strides = array<i32>} : memref<1x128xf32, #tpu.memory_space<vmem>>, vector<1x128xf32>,
      } else {
      }
      %c0_7 = arith.constant 0 : index
      %c0_8 = arith.constant 0 : index
      %13 = vector.load %arg9[%c0_7, %c0_8] : memref<1x128xf32, #tpu.memory_space<vmem>>, vector<1x128xf32>
      %cst_9 = arith.constant dense<0.000000e+00> : vector<128xf32>
      %14 = vector.multi_reduction <add>, %3, %cst_9 [0] : vector<32x128xf32> to vector<128xf32>
      %15 = vector.shape_cast %14 : vector<128xf32> to vector<1x128xf32>
      %16 = arith.addf %13, %15 : vector<1x128xf32>
      %c0_10 = arith.constant 0 : index
      %c0_11 = arith.constant 0 : index
      %17 = vector.load %arg9[%c0_10, %c0_11] : memref<1x128xf32, #tpu.memory_space<vmem>>, vector<1x128xf32>
      tpu.vector_store %arg9[%c0_10, %c0_11], %16 {strides = array<i32>} : memref<1x128xf32, #tpu.memory_space<vmem>>, vector<1x128xf32>,
      %c0_12 = arith.constant 0 : index
      %c0_13 = arith.constant 0 : index
      %18 = vector.load %arg10[%c0_12, %c0_13] : memref<1x128xf32, #tpu.memory_space<vmem>>, vector<1x128xf32>
      %19 = arith.mulf %3, %3 : vector<32x128xf32>
      %cst_14 = arith.constant dense<0.000000e+00> : vector<128xf32>
      %20 = vector.multi_reduction <add>, %19, %cst_14 [0] : vector<32x128xf32> to vector<128xf32>
      %21 = vector.shape_cast %20 : vector<128xf32> to vector<1x128xf32>
      %22 = arith.addf %18, %21 : vector<1x128xf32>
      %c0_15 = arith.constant 0 : index
      %c0_16 = arith.constant 0 : index
      %23 = vector.load %arg10[%c0_15, %c0_16] : memref<1x128xf32, #tpu.memory_space<vmem>>, vector<1x128xf32>
      tpu.vector_store %arg10[%c0_15, %c0_16], %22 {strides = array<i32>} : memref<1x128xf32, #tpu.memory_space<vmem>>, vector<1x128xf32>,
    } else {
    }
    %c1_i32 = arith.constant 1 : i32
    %7 = arith.cmpi eq, %arg0, %c1_i32 : i32
    %8 = arith.extui %7 : i1 to i32
    %c0_i32_4 = arith.constant 0 : i32
    %9 = arith.cmpi ne, %8, %c0_i32_4 : i32
    scf.if %9 {
      %c0_i32_5 = arith.constant 0 : i32
      %10 = arith.cmpi eq, %arg1, %c0_i32_5 : i32
      %11 = arith.extui %10 : i1 to i32
      %c0_i32_6 = arith.constant 0 : i32
      %12 = arith.cmpi ne, %11, %c0_i32_6 : i32
      scf.if %12 {
        %c0_19 = arith.constant 0 : index
        %c0_20 = arith.constant 0 : index
        %28 = vector.load %arg9[%c0_19, %c0_20] : memref<1x128xf32, #tpu.memory_space<vmem>>, vector<1x128xf32>
        %cst_21 = arith.constant 1.562500e-02 : f32
        %29 = vector.broadcast %cst_21 : f32 to vector<1x128xf32>
        %30 = arith.mulf %28, %29 : vector<1x128xf32>
        %c0_22 = arith.constant 0 : index
        %c0_23 = arith.constant 0 : index
        %31 = vector.load %arg10[%c0_22, %c0_23] : memref<1x128xf32, #tpu.memory_space<vmem>>, vector<1x128xf32>
        %cst_24 = arith.constant 1.562500e-02 : f32
        %32 = vector.broadcast %cst_24 : f32 to vector<1x128xf32>
        %33 = arith.mulf %31, %32 : vector<1x128xf32>
        %34 = arith.mulf %30, %30 : vector<1x128xf32>
        %35 = arith.subf %33, %34 : vector<1x128xf32>
        %c0_25 = arith.constant 0 : index
        %c0_26 = arith.constant 0 : index
        %36 = vector.load %arg4[%c0_25, %c0_26] : memref<1x128xf32, #tpu.memory_space<vmem>>, vector<1x128xf32>
        %cst_27 = arith.constant 9.99999974E-6 : f32
        %37 = vector.broadcast %cst_27 : f32 to vector<1x128xf32>
        %38 = arith.addf %35, %37 : vector<1x128xf32>
        %39 = math.rsqrt %38 : vector<1x128xf32>
        %40 = arith.mulf %36, %39 : vector<1x128xf32>
        %c0_28 = arith.constant 0 : index
        %c0_29 = arith.constant 0 : index
        %41 = vector.load %arg11[%c0_28, %c0_29] : memref<1x128xf32, #tpu.memory_space<vmem>>, vector<1x128xf32>
        tpu.vector_store %arg11[%c0_28, %c0_29], %40 {strides = array<i32>} : memref<1x128xf32, #tpu.memory_space<vmem>>, vector<1x128xf32>,
        %c0_30 = arith.constant 0 : index
        %c0_31 = arith.constant 0 : index
        %42 = vector.load %arg5[%c0_30, %c0_31] : memref<1x128xf32, #tpu.memory_space<vmem>>, vector<1x128xf32>
        %43 = arith.mulf %30, %40 : vector<1x128xf32>
        %44 = arith.subf %42, %43 : vector<1x128xf32>
        %c0_32 = arith.constant 0 : index
        %c0_33 = arith.constant 0 : index
        %45 = vector.load %arg12[%c0_32, %c0_33] : memref<1x128xf32, #tpu.memory_space<vmem>>, vector<1x128xf32>
        tpu.vector_store %arg12[%c0_32, %c0_33], %44 {strides = array<i32>} : memref<1x128xf32, #tpu.memory_space<vmem>>, vector<1x128xf32>,
      } else {
      }
      %c0_7 = arith.constant 0 : index
      %c0_8 = arith.constant 0 : index
      %13 = vector.load %arg11[%c0_7, %c0_8] : memref<1x128xf32, #tpu.memory_space<vmem>>, vector<1x128xf32>
      %14 = vector.broadcast %13 : vector<1x128xf32> to vector<32x128xf32>
      %15 = arith.mulf %3, %14 : vector<32x128xf32>
      %c0_9 = arith.constant 0 : index
      %c0_10 = arith.constant 0 : index
      %16 = vector.load %arg12[%c0_9, %c0_10] : memref<1x128xf32, #tpu.memory_space<vmem>>, vector<1x128xf32>
      %17 = vector.broadcast %16 : vector<1x128xf32> to vector<32x128xf32>
      %18 = arith.addf %15, %17 : vector<32x128xf32>
      %cst_11 = arith.constant 0.000000e+00 : f32
      %19 = vector.broadcast %cst_11 : f32 to vector<32x128xf32>
      %20 = arith.maximumf %18, %19 : vector<32x128xf32>
      %21 = arith.truncf %20 : vector<32x128xf32> to vector<32x128xbf16>
      %c0_12 = arith.constant 0 : index
      %c0_13 = arith.constant 0 : index
      %22 = vector.load %arg6[%c0_12, %c0_13] : memref<128x128xbf16, #tpu.memory_space<vmem>>, vector<128x128xbf16>
      %cst_14 = arith.constant dense<0.000000e+00> : vector<32x128xf32>
      %23 = tpu.matmul %21, %22, %cst_14 {dimension_numbers = #tpu.dot_dimension_numbers<[1], [0], [0], [1], [0, 0, 1, 1], [], []>} : vector<32x128xbf16>, vector<128x128xbf16>, vector<32x128xf32> -> vector<32x128xf32>
      %c0_15 = arith.constant 0 : index
      %c0_16 = arith.constant 0 : index
      %24 = vector.load %arg7[%c0_15, %c0_16] : memref<1x128xf32, #tpu.memory_space<vmem>>, vector<1x128xf32>
      %25 = vector.broadcast %24 : vector<1x128xf32> to vector<32x128xf32>
      %26 = arith.addf %23, %25 : vector<32x128xf32>
      %c0_17 = arith.constant 0 : index
      %c0_18 = arith.constant 0 : index
      %27 = vector.load %arg8[%c0_17, %c0_18] : memref<32x128xf32, #tpu.memory_space<vmem>>, vector<32x128xf32>
      tpu.vector_store %arg8[%c0_17, %c0_18], %26 {strides = array<i32>} : memref<32x128xf32, #tpu.memory_space<vmem>>, vector<32x128xf32>,
    } else {
    }
    return
  }
  func.func @transform_0(%arg0: i32, %arg1: i32) -> (i32, i32) {
    %c0_i32 = arith.constant 0 : i32
    %c0_i32_0 = arith.constant 0 : i32
    return %arg1, %c0_i32 : i32, i32
  }
  func.func @transform_1(%arg0: i32, %arg1: i32) -> (i32, i32) {
    %c0_i32 = arith.constant 0 : i32
    %c0_i32_0 = arith.constant 0 : i32
    %c0_i32_1 = arith.constant 0 : i32
    return %c0_i32, %c0_i32_0 : i32, i32
  }
  func.func @transform_2(%arg0: i32, %arg1: i32) -> (i32, i32) {
    %c0_i32 = arith.constant 0 : i32
    %c0_i32_0 = arith.constant 0 : i32
    %c0_i32_1 = arith.constant 0 : i32
    return %c0_i32, %c0_i32_0 : i32, i32
  }
  func.func @transform_3(%arg0: i32, %arg1: i32) -> (i32, i32) {
    %c0_i32 = arith.constant 0 : i32
    %c0_i32_0 = arith.constant 0 : i32
    %c0_i32_1 = arith.constant 0 : i32
    return %c0_i32, %c0_i32_0 : i32, i32
  }
  func.func @transform_4(%arg0: i32, %arg1: i32) -> (i32, i32) {
    %c0_i32 = arith.constant 0 : i32
    %c0_i32_0 = arith.constant 0 : i32
    %c0_i32_1 = arith.constant 0 : i32
    return %c0_i32, %c0_i32_0 : i32, i32
  }
  func.func @transform_5(%arg0: i32, %arg1: i32) -> (i32, i32) {
    %c0_i32 = arith.constant 0 : i32
    %c0_i32_0 = arith.constant 0 : i32
    %c0_i32_1 = arith.constant 0 : i32
    return %c0_i32, %c0_i32_0 : i32, i32
  }
  func.func @transform_6(%arg0: i32, %arg1: i32) -> (i32, i32) {
    %0 = arith.muli %arg0, %arg1 : i32
    %c0_i32 = arith.constant 0 : i32
    %c0_i32_0 = arith.constant 0 : i32
    return %0, %c0_i32 : i32, i32
  }
}

</mosaic_0001>

<llo_original>
// kernel: tpu_custom_call.1
$region0: #{tpu_custom_call.1}
  #allocation0 [shape = 'u32[]', space=smem, size = 0x4, offset = 0x4, fixed_abs, tag = 'smem constant byte address 0x4 - core index']
  #allocation1 [shape = 'u32[144,128]{1,0:T(1,128)}', space=vmem, size = 0x12000, scoped, tag = 'internal scratch']
  #allocation2 [shape = 'f32[1,128]{1,0:T(1,128)}', space=vmem, size = 0x200, scoped, tag = 'scratch operand']
  #allocation3 [shape = 'f32[1,128]{1,0:T(1,128)}', space=vmem, size = 0x200, scoped, tag = 'scratch operand']
  #allocation4 [shape = 'f32[1,128]{1,0:T(1,128)}', space=vmem, size = 0x200, scoped, tag = 'scratch operand']
  #allocation5 [shape = 'f32[1,128]{1,0:T(1,128)}', space=vmem, size = 0x200, scoped, tag = 'scratch operand']
  %s0 = inlined_call_operand.vmem [shape: f32[64,32], index: 0, kind: input, shape index: {}]
  %s1 = inlined_call_operand.vmem [shape: bf16[32,128], index: 1, kind: input, shape index: {}]
  %s2 = inlined_call_operand.vmem [shape: f32[1,128], index: 2, kind: input, shape index: {}]
  %s3 = inlined_call_operand.vmem [shape: f32[1,128], index: 3, kind: input, shape index: {}]
  %s4 = inlined_call_operand.vmem [shape: bf16[128,128], index: 4, kind: input, shape index: {}]
  %s5 = inlined_call_operand.vmem [shape: f32[1,128], index: 5, kind: input, shape index: {}]
  %s6 = inlined_call_operand.hbm [shape: f32[64,128], index: 6, kind: output, shape index: {}]
  %s7 = sld [smem:[#allocation0]]
  $region73: #{tpu_custom_call.1} parent=0
    _
  %s9 = ssub.s32 1, %s7
  %s10 = scalar_select 0, %s9, %s7
  $region1: #{tpu_custom_call.1} parent=0
    #allocation6 [shape = 'u8[32768]{0}', space=vmem, size = 0x8000, scoped, tag = 'output window, operand 0']
    #allocation7 [shape = 's32[2]{0}', space=sflag, size = 0x8, scoped, tag = 'scoped memory for tpu_custom_call.1']
    %11 = vsyncpa [#allocation7], 0
    %s12 = scalar_lea.sflag [#allocation7], 1
    %13 = vsyncpa %s12, 0
    loop: start=0, step=1, limit=6
    $region2: #{tpu_custom_call.1} parent=1 // loop_pre_header
      _
    $region3: #{tpu_custom_call.1} parent=1 // loop_header
      %s15 = sphi 0, %s19
      %p16 = scmp.ge.s32.totalorder %s15, 6
      %s22 = sphi 0, %s34
      %s23 = sphi 0, %s30
      %s24 = sphi 0, %s22
      %s25 = sphi 0, %s23
      %s26 = sphi 0, %s24
      %s27 = sphi 0, %s25
      %s37 = sphi 0, %s39
      %s40 = sphi 0, %s37
      %s41 = sphi 0, %s40
      %s57 = sphi 0, %s41
      %s61 = sphi 0, %s61
      %s63 = sphi 0, %s61
      %s64 = sphi 0, %s63
      %s78 = sphi 0, %s64
      %s82 = sphi 0, %s82
      %s84 = sphi 0, %s82
      %s85 = sphi 0, %s84
      %s99 = sphi 0, %s85
      %s103 = sphi 0, %s103
      %s105 = sphi 0, %s103
      %s106 = sphi 0, %s105
      %s120 = sphi 0, %s106
      %s124 = sphi 0, %s124
      %s126 = sphi 0, %s124
      %s127 = sphi 0, %s126
      %s141 = sphi 0, %s127
      %s145 = sphi 0, %s145
      %s147 = sphi 0, %s145
      %s148 = sphi 0, %s147
      %s162 = sphi 0, %s148
      %s170 = sphi 0, %s172
      %s173 = sphi 0, %s170
      %s174 = sphi 0, %s173
      %s190 = sphi 0, %s174
    $region4: #{tpu_custom_call.1} parent=1 // loop_header_branch
      %18 = sbr.rel (%p16) target = $region8
    $region5: #{tpu_custom_call.1} parent=1 // loop_body
      %s20 = ssub.s32 %s15, 1
      %s21 = ssub.s32 %s15, 2
      %s28 = sadd.s32 1, %s23
      %p29 = scmp.ge.s32.totalorder %s28, 2
      %s30 = scalar_select %p29, 0, %s28
      %s31 = sadd.s32 1, %s22
      %s32 = scalar_select %p29, %s31, %s22
      %p33 = scmp.ge.s32.totalorder %s32, 2
      %s34 = scalar_select %p33, 0, %s32
      %s35 = ssub.s32 %s23, %s30
      %p36 = scmp.eq.s32.totalorder %s35, 0
      %s38 = sadd.s32 %s37, 1
      %s39 = scalar_select %p36, %s37, %s38
      %p42 = pneg %p36
      %p43 = scmp.eq.s32.totalorder %s15, 3
      %p44 = por %p42, %p43
      %p45 = scmp.ne.s32.totalorder %s37, %s40
      %p46 = scmp.eq.s32.totalorder %s15, 0
      %p47 = por %p45, %p46
      %p48 = scmp.ne.s32.totalorder %s37, %s40
      %p49 = scmp.eq.s32.totalorder %s20, 3
      %p50 = por %p48, %p49
      %p51 = scmp.ne.s32.totalorder %s40, %s41
      %p52 = scmp.eq.s32.totalorder %s20, 0
      %p53 = por %p51, %p52
      %p54 = scmp.ne.s32.totalorder %s40, %s41
      %p55 = scmp.eq.s32.totalorder %s21, 3
      %p56 = por %p54, %p55
      %p58 = scmp.ne.s32.totalorder %s41, %s57
      %p59 = scmp.eq.s32.totalorder %s21, 0
      %p60 = por %p58, %p59
      %s62 = sadd.s32 %s61, 1
      %p65 = scmp.eq.s32.totalorder %s15, 3
      %p66 = scmp.ne.s32.totalorder %s61, %s63
      %p67 = scmp.eq.s32.totalorder %s15, 0
      %p68 = por %p66, %p67
      %p69 = scmp.ne.s32.totalorder %s61, %s63
      %p70 = scmp.eq.s32.totalorder %s20, 3
      %p71 = por %p69, %p70
      %p72 = scmp.ne.s32.totalorder %s63, %s64
      %p73 = scmp.eq.s32.totalorder %s20, 0
      %p74 = por %p72, %p73
      %p75 = scmp.ne.s32.totalorder %s63, %s64
      %p76 = scmp.eq.s32.totalorder %s21, 3
      %p77 = por %p75, %p76
      %p79 = scmp.ne.s32.totalorder %s64, %s78
      %p80 = scmp.eq.s32.totalorder %s21, 0
      %p81 = por %p79, %p80
      %s83 = sadd.s32 %s82, 1
      %p86 = scmp.eq.s32.totalorder %s15, 3
      %p87 = scmp.ne.s32.totalorder %s82, %s84
      %p88 = scmp.eq.s32.totalorder %s15, 0
      %p89 = por %p87, %p88
      %p90 = scmp.ne.s32.totalorder %s82, %s84
      %p91 = scmp.eq.s32.totalorder %s20, 3
      %p92 = por %p90, %p91
      %p93 = scmp.ne.s32.totalorder %s84, %s85
      %p94 = scmp.eq.s32.totalorder %s20, 0
      %p95 = por %p93, %p94
      %p96 = scmp.ne.s32.totalorder %s84, %s85
      %p97 = scmp.eq.s32.totalorder %s21, 3
      %p98 = por %p96, %p97
      %p100 = scmp.ne.s32.totalorder %s85, %s99
      %p101 = scmp.eq.s32.totalorder %s21, 0
      %p102 = por %p100, %p101
      %s104 = sadd.s32 %s103, 1
      %p107 = scmp.eq.s32.totalorder %s15, 3
      %p108 = scmp.ne.s32.totalorder %s103, %s105
      %p109 = scmp.eq.s32.totalorder %s15, 0
      %p110 = por %p108, %p109
      %p111 = scmp.ne.s32.totalorder %s103, %s105
      %p112 = scmp.eq.s32.totalorder %s20, 3
      %p113 = por %p111, %p112
      %p114 = scmp.ne.s32.totalorder %s105, %s106
      %p115 = scmp.eq.s32.totalorder %s20, 0
      %p116 = por %p114, %p115
      %p117 = scmp.ne.s32.totalorder %s105, %s106
      %p118 = scmp.eq.s32.totalorder %s21, 3
      %p119 = por %p117, %p118
      %p121 = scmp.ne.s32.totalorder %s106, %s120
      %p122 = scmp.eq.s32.totalorder %s21, 0
      %p123 = por %p121, %p122
      %s125 = sadd.s32 %s124, 1
      %p128 = scmp.eq.s32.totalorder %s15, 3
      %p129 = scmp.ne.s32.totalorder %s124, %s126
      %p130 = scmp.eq.s32.totalorder %s15, 0
      %p131 = por %p129, %p130
      %p132 = scmp.ne.s32.totalorder %s124, %s126
      %p133 = scmp.eq.s32.totalorder %s20, 3
      %p134 = por %p132, %p133
      %p135 = scmp.ne.s32.totalorder %s126, %s127
      %p136 = scmp.eq.s32.totalorder %s20, 0
      %p137 = por %p135, %p136
      %p138 = scmp.ne.s32.totalorder %s126, %s127
      %p139 = scmp.eq.s32.totalorder %s21, 3
      %p140 = por %p138, %p139
      %p142 = scmp.ne.s32.totalorder %s127, %s141
      %p143 = scmp.eq.s32.totalorder %s21, 0
      %p144 = por %p142, %p143
      %s146 = sadd.s32 %s145, 1
      %p149 = scmp.eq.s32.totalorder %s15, 3
      %p150 = scmp.ne.s32.totalorder %s145, %s147
      %p151 = scmp.eq.s32.totalorder %s15, 0
      %p152 = por %p150, %p151
      %p153 = scmp.ne.s32.totalorder %s145, %s147
      %p154 = scmp.eq.s32.totalorder %s20, 3
      %p155 = por %p153, %p154
      %p156 = scmp.ne.s32.totalorder %s147, %s148
      %p157 = scmp.eq.s32.totalorder %s20, 0
      %p158 = por %p156, %p157
      %p159 = scmp.ne.s32.totalorder %s147, %s148
      %p160 = scmp.eq.s32.totalorder %s21, 3
      %p161 = por %p159, %p160
      %p163 = scmp.ne.s32.totalorder %s148, %s162
      %p164 = scmp.eq.s32.totalorder %s21, 0
      %p165 = por %p163, %p164
      %s166 = smul.u32 %s22, %s23
      %s167 = smul.u32 %s34, %s30
      %s168 = ssub.s32 %s166, %s167
      %p169 = scmp.eq.s32.totalorder %s168, 0
      %s171 = sadd.s32 %s170, 1
      %s172 = scalar_select %p169, %s170, %s171
      %p175 = pneg %p169
      %p176 = scmp.eq.s32.totalorder %s15, 3
      %p177 = por %p175, %p176
      %p178 = scmp.ne.s32.totalorder %s170, %s173
      %p179 = scmp.eq.s32.totalorder %s15, 0
      %p180 = por %p178, %p179
      %p181 = scmp.ne.s32.totalorder %s170, %s173
      %p182 = scmp.eq.s32.totalorder %s20, 3
      %p183 = por %p181, %p182
      %p184 = scmp.ne.s32.totalorder %s173, %s174
      %p185 = scmp.eq.s32.totalorder %s20, 0
      %p186 = por %p184, %p185
      %p187 = scmp.ne.s32.totalorder %s173, %s174
      %p188 = scmp.eq.s32.totalorder %s21, 3
      %p189 = por %p187, %p188
      %p191 = scmp.ne.s32.totalorder %s174, %s190
      %p192 = scmp.eq.s32.totalorder %s21, 0
      %p193 = por %p191, %p192
      %p194 = scmp.le.s32.totalorder 1, %s15
      %p195 = scmp.lt.s32.totalorder %s15, 5
      %p196 = pnand %p194, %p195
      %p197 = pneg %p196
      // Predicated region
      $region9: #{tpu_custom_call.1} parent=5 // pred_check
        _
      $region10: #{tpu_custom_call.1} parent=5 // pred_check_branch
        %199 = sbr.rel (%p196) target = $region12
      $region11: #{tpu_custom_call.1} parent=5 // pred_region
        %s200 = ssub.s32 %s15, 1
        // Predicated region
        $region13: #{tpu_custom_call.1} parent=11 // pred_check
          %p201 = pneg %p74
        $region14: #{tpu_custom_call.1} parent=11 // pred_check_branch
          %203 = sbr.rel (%p201) target = $region16
        $region15: #{tpu_custom_call.1} parent=11 // pred_region
          _
        $region16: #{tpu_custom_call.1} parent=11 // pred_fallthru
          _
        // Predicated region
        $region17: #{tpu_custom_call.1} parent=11 // pred_check
          %p204 = pneg %p95
        $region18: #{tpu_custom_call.1} parent=11 // pred_check_branch
          %206 = sbr.rel (%p204) target = $region20
        $region19: #{tpu_custom_call.1} parent=11 // pred_region
          _
        $region20: #{tpu_custom_call.1} parent=11 // pred_fallthru
          _
        // Predicated region
        $region21: #{tpu_custom_call.1} parent=11 // pred_check
          %p207 = pneg %p116
        $region22: #{tpu_custom_call.1} parent=11 // pred_check_branch
          %209 = sbr.rel (%p207) target = $region24
        $region23: #{tpu_custom_call.1} parent=11 // pred_region
          _
        $region24: #{tpu_custom_call.1} parent=11 // pred_fallthru
          _
        // Predicated region
        $region25: #{tpu_custom_call.1} parent=11 // pred_check
          %p210 = pneg %p137
        $region26: #{tpu_custom_call.1} parent=11 // pred_check_branch
          %212 = sbr.rel (%p210) target = $region28
        $region27: #{tpu_custom_call.1} parent=11 // pred_region
          _
        $region28: #{tpu_custom_call.1} parent=11 // pred_fallthru
          _
        // Predicated region
        $region29: #{tpu_custom_call.1} parent=11 // pred_check
          %p213 = pneg %p158
        $region30: #{tpu_custom_call.1} parent=11 // pred_check_branch
          %215 = sbr.rel (%p213) target = $region32
        $region31: #{tpu_custom_call.1} parent=11 // pred_region
          _
        $region32: #{tpu_custom_call.1} parent=11 // pred_fallthru
          _
      $region12: #{tpu_custom_call.1} parent=5 // pred_fallthru
        _
      %p216 = scmp.lt.s32.totalorder %s15, 4
      // Predicated region
      $region33: #{tpu_custom_call.1} parent=5 // pred_check
        %p217 = pneg %p216
      $region34: #{tpu_custom_call.1} parent=5 // pred_check_branch
        %219 = sbr.rel (%p217) target = $region36
      $region35: #{tpu_custom_call.1} parent=5 // pred_region
        // Predicated region
        $region37: #{tpu_custom_call.1} parent=35 // pred_check
          %p220 = pneg %p47
        $region38: #{tpu_custom_call.1} parent=35 // pred_check_branch
          %222 = sbr.rel (%p220) target = $region40
        $region39: #{tpu_custom_call.1} parent=35 // pred_region
          %s223 = smul.u32 4, %s23
          %p224 = scmp.lt.s32.totalorder %s223, 7
          %s225 = scalar_select %p224, %s223, 7
          %s226 = smul.addr %s225, 8
          %s227 = scalar_lea.vmem %s0, %s226
          %s228 = smul.u32 4, %s23
        $region40: #{tpu_custom_call.1} parent=35 // pred_fallthru
          _
      $region36: #{tpu_custom_call.1} parent=5 // pred_fallthru
        _
      %p229 = scmp.le.s32.totalorder 1, %s15
      %p230 = scmp.lt.s32.totalorder %s15, 5
      %p231 = pnand %p229, %p230
      %p232 = pneg %p231
      // Predicated region
      $region41: #{tpu_custom_call.1} parent=5 // pred_check
        _
      $region42: #{tpu_custom_call.1} parent=5 // pred_check_branch
        %234 = sbr.rel (%p231) target = $region44
      $region43: #{tpu_custom_call.1} parent=5 // pred_region
        %s235 = ssub.s32 %s15, 1
        %s236 = smul.u32 4, %s25
        %p237 = scmp.lt.s32.totalorder %s236, 7
        %s238 = scalar_select %p237, %s236, 7
        %s239 = smul.addr %s238, 8
        %s240 = scalar_lea.vmem %s0, %s239
        %p241 = pneg %p53
        %p242 = pneg %p50
        %p243 = pneg %p74
        %p244 = pneg %p71
        %p245 = pneg %p95
        %p246 = pneg %p92
        %p247 = pneg %p116
        %p248 = pneg %p113
        %p249 = pneg %p137
        %p250 = pneg %p134
        %p251 = pneg %p158
        %p252 = pneg %p155
        %p253 = pneg %p186
        %p254 = pneg %p183
        %s255 = sand.u32 %s173, 1
        %s256 = scalar_lea.sflag [#allocation7], %s255
        %s257 = sand.u32 %s173, 1
        %s258 = smul.addr %s257, 32
        %s259 = scalar_lea.vmem [#allocation6], %s258
        %s260 = smul.u32 4, %s25
        %p261 = scmp.lt.s32.totalorder %s260, 7
        %s262 = scalar_select %p261, %s260, 7
        %s263 = smul.addr %s262, 8
        %s264 = scalar_lea.vmem %s0, %s263
        %s265 = smul.u32 4, %s25
        %s266 = smul.u32 %s24, %s25
        %s267 = smul.u32 4, %s266
        %v269 = vld [vmem:[%s264] sm:$0xff]
        %v270 = vld [vmem:[%s264 + $0x8] sm:$0xff]
        %v271 = vld [vmem:[%s264 + $0x10] sm:$0xff]
        %v272 = vld [vmem:[%s264 + $0x18] sm:$0xff]
        %v273 = vpack.c.bf16 %v270, %v269
        %v274 = vpack.c.bf16 %v272, %v271
        %v275 = vld [vmem:[%s1] sm:$0xf]
        %v276 = vld [vmem:[%s1 + $0x4] sm:$0xf]
        %v277 = vld [vmem:[%s1 + $0x8] sm:$0xf]
        %v278 = vld [vmem:[%s1 + $0xc] sm:$0xf]
        %v283 = vunpack.c.l.b16 %v275
        %v284 = vunpack.c.l.b16 %v276
        %v285 = vunpack.c.l.b16 %v277
        %v286 = vunpack.c.l.b16 %v278
        %v287 = vpack.c.b16 %v284, %v283
        %v288 = vpack.c.b16 %v286, %v285
        %vm291 = vcmask 261120
        %v293 = vsel %vm291, %v273, 0
        %v296 = vsel %vm291, %v274, 0
        %298 = vmatprep.subr.bf16.mxu0 0
        %299 = vmatpush1.bf16.msra.mxu0 0
        %300 = vmatprep.subr.bf16.mxu0 0
        %301 = vmatpush1.bf16.msra.mxu0 0
        %302 = vmatprep.subr.bf16.mxu0 0
        %303 = vmatpush1.bf16.msra.mxu0 0
        %304 = vmatprep.subr.bf16.mxu0 0
        %305 = vmatpush1.bf16.msra.mxu0 0
        %306 = vmatprep.subr.bf16.mxu0 0
        %307 = vmatpush1.bf16.msra.mxu0 0
        %308 = vmatprep.subr.bf16.mxu0 0
        %309 = vmatpush1.bf16.msra.mxu0 0
        %310 = vmatprep.subr.bf16.mxu0 0
        %311 = vmatpush1.bf16.msra.mxu0 %v288
        %312 = vmatprep.subr.bf16.mxu0 0
        %313 = vmatpush1.bf16.msra.mxu0 %v287
        %314 = vmatprep.subr.bf16.mxu0 0
        %315 = vmatpush2.bf16.msra.mxu0 0
        %316 = vmatprep.subr.bf16.mxu0 0
        %317 = vmatpush2.bf16.msra.mxu0 0
        %318 = vmatprep.subr.bf16.mxu0 0
        %319 = vmatpush2.bf16.msra.mxu0 0
        %320 = vmatprep.subr.bf16.mxu0 0
        %321 = vmatpush2.bf16.msra.mxu0 0
        %322 = vmatprep.subr.bf16.mxu0 0
        %323 = vmatpush2.bf16.msra.mxu0 0
        %324 = vmatprep.subr.bf16.mxu0 0
        %325 = vmatpush2.bf16.msra.mxu0 0
        %326 = vmatprep.subr.bf16.mxu0 0
        %327 = vmatpush2.bf16.msra.mxu0 0
        %328 = vmatprep.subr.bf16.mxu0 0
        %329 = vmatpush2.bf16.msra.mxu0 0
        %330 = vmatprep.mubr.bf16.mxu0 0
        %331 = vmatmul.mubr.bf16.gmra.mxu0 %v293
        %v332 = vpop.f32.mrf.mxu0
        %v333 = vadd.f32 0.0, %v332
        %v334 = vpop.f32.mrf.mxu0
        %v335 = vpop.f32.mrf.mxu0
        %v336 = vadd.f32 0.0, %v335
        %v337 = vpop.f32.mrf.mxu0
        %338 = vmatprep.mubr.bf16.mxu0 0
        %339 = vmatmul.mubr.bf16.gmra.mxu0 %v296
        %v340 = vpop.f32.mrf.mxu0
        %v341 = vadd.f32 0.0, %v340
        %v342 = vpop.f32.mrf.mxu0
        %v343 = vpop.f32.mrf.mxu0
        %v344 = vadd.f32 0.0, %v343
        %v345 = vpop.f32.mrf.mxu0
        %346 = vdwg.mxu0
        %p347 = scmp.eq.s32.totalorder %s24, 0
        // Predicated region
        $region45: #{tpu_custom_call.1} parent=43 // pred_check
          %p348 = pneg %p347
        $region46: #{tpu_custom_call.1} parent=43 // pred_check_branch
          %350 = sbr.rel (%p348) target = $region48
        $region47: #{tpu_custom_call.1} parent=43 // pred_region
          %p351 = scmp.eq.s32.totalorder %s25, 0
          // Predicated region
          $region49: #{tpu_custom_call.1} parent=47 // pred_check
            %p352 = pneg %p351
          $region50: #{tpu_custom_call.1} parent=47 // pred_check_branch
            %354 = sbr.rel (%p352) target = $region52
          $region51: #{tpu_custom_call.1} parent=47 // pred_region
            %355 = vst [vmem:[#allocation2] sm:$0x1] 0.0
            %356 = vst [vmem:[#allocation3] sm:$0x1] 0.0
          $region52: #{tpu_custom_call.1} parent=47 // pred_fallthru
            _
          %v357 = vld [vmem:[#allocation2] sm:$0x1]
          %v358 = vadd.f32 %v333, %v336
          %v359 = vadd.f32 %v358, %v341
          %v360 = vadd.f32 %v359, %v344
          %v361 = vrot.slane %v360, 4
          %v362 = vadd.f32 %v360, %v361
          %v363 = vrot.slane %v362, 2
          %v364 = vadd.f32 %v362, %v363
          %v365 = vrot.slane %v364, 1
          %v366 = vadd.f32 %v364, %v365
          %v367 = vadd.f32 %v357, %v366
          %368 = vst [vmem:[#allocation2] sm:$0x1] %v367
          %v369 = vld [vmem:[#allocation3] sm:$0x1]
          %v370 = vmul.f32 %v333, %v333
          %v371 = vmul.f32 %v336, %v336
          %v372 = vmul.f32 %v341, %v341
          %v373 = vmul.f32 %v344, %v344
          %v374 = vadd.f32 %v370, %v371
          %v375 = vadd.f32 %v374, %v372
          %v376 = vadd.f32 %v375, %v373
          %v377 = vrot.slane %v376, 4
          %v378 = vadd.f32 %v376, %v377
          %v379 = vrot.slane %v378, 2
          %v380 = vadd.f32 %v378, %v379
          %v381 = vrot.slane %v380, 1
          %v382 = vadd.f32 %v380, %v381
          %v383 = vadd.f32 %v369, %v382
          %384 = vst [vmem:[#allocation3] sm:$0x1] %v383
        $region48: #{tpu_custom_call.1} parent=43 // pred_fallthru
          _
        %p385 = scmp.eq.s32.totalorder %s24, 1
        // Predicated region
        $region53: #{tpu_custom_call.1} parent=43 // pred_check
          %p386 = pneg %p385
        $region54: #{tpu_custom_call.1} parent=43 // pred_check_branch
          %388 = sbr.rel (%p386) target = $region56
        $region55: #{tpu_custom_call.1} parent=43 // pred_region
          %p389 = scmp.eq.s32.totalorder %s25, 0
          // Predicated region
          $region57: #{tpu_custom_call.1} parent=55 // pred_check
            %p390 = pneg %p389
          $region58: #{tpu_custom_call.1} parent=55 // pred_check_branch
            %392 = sbr.rel (%p390) target = $region60
          $region59: #{tpu_custom_call.1} parent=55 // pred_region
            %v393 = vld [vmem:[#allocation2] sm:$0x1]
            %v394 = vmul.f32 %v393, 0.015625
            %v395 = vld [vmem:[#allocation3] sm:$0x1]
            %v396 = vmul.f32 %v395, 0.015625
            %v397 = vmul.f32 %v394, %v394
            %v398 = vsub.f32 %v396, %v397
            %v399 = vld [vmem:[%s2] sm:$0x1]
            %v400 = vadd.f32 %v398, 1e-05
            %v401 = vrsqrt.pop %v400
            %v402 = vmul.f32 %v399, %v401
            %403 = vst [vmem:[#allocation4] sm:$0x1] %v402
            %v404 = vld [vmem:[%s3] sm:$0x1]
            %v405 = vmul.f32 %v394, %v402
            %v406 = vsub.f32 %v404, %v405
            %407 = vst [vmem:[#allocation5] sm:$0x1] %v406
          $region60: #{tpu_custom_call.1} parent=55 // pred_fallthru
            _
          %v408 = vld [vmem:[#allocation4] sm:$0x1]
          %v410 = vlaneseq
          %v411 = vshrl.u32 %v410, 7
          %v412 = vsub.s32 0, %v411
          %v413 = vrot.slane %v408, %v412
          %v415 = vmul.f32 %v333, %v413
          %v416 = vmul.f32 %v336, %v413
          %v417 = vmul.f32 %v341, %v413
          %v418 = vmul.f32 %v344, %v413
          %v419 = vld [vmem:[#allocation5] sm:$0x1]
          %v421 = vlaneseq
          %v422 = vshrl.u32 %v421, 7
          %v423 = vsub.s32 0, %v422
          %v424 = vrot.slane %v419, %v423
          %v426 = vadd.f32 %v415, %v424
          %v427 = vadd.f32 %v416, %v424
          %v428 = vadd.f32 %v417, %v424
          %v429 = vadd.f32 %v418, %v424
          %v430 = vmax.f32 %v426, 0.0
          %v431 = vmax.f32 %v427, 0.0
          %v432 = vmax.f32 %v428, 0.0
          %v433 = vmax.f32 %v429, 0.0
          %v434 = vpack.c.bf16 %v431, %v430
          %v435 = vpack.c.bf16 %v433, %v432
          %v436 = vld [vmem:[%s4] sm:$0xf]
          %v437 = vld [vmem:[%s4 + $0x4] sm:$0xf]
          %v438 = vld [vmem:[%s4 + $0x8] sm:$0xf]
          %v439 = vld [vmem:[%s4 + $0xc] sm:$0xf]
          %v440 = vld [vmem:[%s4 + $0x10] sm:$0xf]
          %v441 = vld [vmem:[%s4 + $0x14] sm:$0xf]
          %v442 = vld [vmem:[%s4 + $0x18] sm:$0xf]
          %v443 = vld [vmem:[%s4 + $0x1c] sm:$0xf]
          %v444 = vld [vmem:[%s4 + $0x20] sm:$0xf]
          %v445 = vld [vmem:[%s4 + $0x24] sm:$0xf]
          %v446 = vld [vmem:[%s4 + $0x28] sm:$0xf]
          %v447 = vld [vmem:[%s4 + $0x2c] sm:$0xf]
          %v448 = vld [vmem:[%s4 + $0x30] sm:$0xf]
          %v449 = vld [vmem:[%s4 + $0x34] sm:$0xf]
          %v450 = vld [vmem:[%s4 + $0x38] sm:$0xf]
          %v451 = vld [vmem:[%s4 + $0x3c] sm:$0xf]
          %v452 = vld [vmem:[%s5] sm:$0x1]
          %v454 = vlaneseq
          %v455 = vshrl.u32 %v454, 7
          %v456 = vsub.s32 0, %v455
          %v457 = vrot.slane %v452, %v456
          %v475 = vunpack.c.l.b16 %v436
          %v476 = vunpack.c.l.b16 %v437
          %v477 = vunpack.c.l.b16 %v438
          %v478 = vunpack.c.l.b16 %v439
          %v479 = vunpack.c.l.b16 %v440
          %v480 = vunpack.c.l.b16 %v441
          %v481 = vunpack.c.l.b16 %v442
          %v482 = vunpack.c.l.b16 %v443
          %v483 = vunpack.c.l.b16 %v444
          %v484 = vunpack.c.l.b16 %v445
          %v485 = vunpack.c.l.b16 %v446
          %v486 = vunpack.c.l.b16 %v447
          %v487 = vunpack.c.l.b16 %v448
          %v488 = vunpack.c.l.b16 %v449
          %v489 = vunpack.c.l.b16 %v450
          %v490 = vunpack.c.l.b16 %v451
          %v491 = vpack.c.b16 %v476, %v475
          %v492 = vpack.c.b16 %v478, %v477
          %v493 = vpack.c.b16 %v480, %v479
          %v494 = vpack.c.b16 %v482, %v481
          %v495 = vpack.c.b16 %v484, %v483
          %v496 = vpack.c.b16 %v486, %v485
          %v497 = vpack.c.b16 %v488, %v487
          %v498 = vpack.c.b16 %v490, %v489
          %507 = vmatprep.subr.bf16.mxu0 0
          %508 = vmatpush1.bf16.msra.mxu0 %v498
          %509 = vmatprep.subr.bf16.mxu0 0
          %510 = vmatpush1.bf16.msra.mxu0 %v497
          %511 = vmatprep.subr.bf16.mxu0 0
          %512 = vmatpush1.bf16.msra.mxu0 %v496
          %513 = vmatprep.subr.bf16.mxu0 0
          %514 = vmatpush1.bf16.msra.mxu0 %v495
          %515 = vmatprep.subr.bf16.mxu0 0
          %516 = vmatpush1.bf16.msra.mxu0 %v494
          %517 = vmatprep.subr.bf16.mxu0 0
          %518 = vmatpush1.bf16.msra.mxu0 %v493
          %519 = vmatprep.subr.bf16.mxu0 0
          %520 = vmatpush1.bf16.msra.mxu0 %v492
          %521 = vmatprep.subr.bf16.mxu0 0
          %522 = vmatpush1.bf16.msra.mxu0 %v491
          %523 = vmatprep.subr.bf16.mxu0 0
          %524 = vmatpush2.bf16.msra.mxu0 0
          %525 = vmatprep.subr.bf16.mxu0 0
          %526 = vmatpush2.bf16.msra.mxu0 0
          %527 = vmatprep.subr.bf16.mxu0 0
          %528 = vmatpush2.bf16.msra.mxu0 0
          %529 = vmatprep.subr.bf16.mxu0 0
          %530 = vmatpush2.bf16.msra.mxu0 0
          %531 = vmatprep.subr.bf16.mxu0 0
          %532 = vmatpush2.bf16.msra.mxu0 0
          %533 = vmatprep.subr.bf16.mxu0 0
          %534 = vmatpush2.bf16.msra.mxu0 0
          %535 = vmatprep.subr.bf16.mxu0 0
          %536 = vmatpush2.bf16.msra.mxu0 0
          %537 = vmatprep.subr.bf16.mxu0 0
          %538 = vmatpush2.bf16.msra.mxu0 0
          %539 = vmatprep.mubr.bf16.mxu0 0
          %540 = vmatmul.mubr.bf16.gmra.mxu0 %v434
          %v541 = vpop.f32.mrf.mxu0
          %v542 = vadd.f32 %v457, %v541
          %v543 = vpop.f32.mrf.mxu0
          %v544 = vpop.f32.mrf.mxu0
          %v545 = vadd.f32 %v457, %v544
          %v546 = vpop.f32.mrf.mxu0
          %547 = vmatprep.mubr.bf16.mxu0 0
          %548 = vmatmul.mubr.bf16.gmra.mxu0 %v435
          %v549 = vpop.f32.mrf.mxu0
          %v550 = vadd.f32 %v457, %v549
          %v551 = vpop.f32.mrf.mxu0
          %v552 = vpop.f32.mrf.mxu0
          %v553 = vadd.f32 %v457, %v552
          %v554 = vpop.f32.mrf.mxu0
          %555 = vdwg.mxu0
          %556 = vst [vmem:[%s259] sm:$0xff] %v542
          %557 = vst [vmem:[%s259 + $0x8] sm:$0xff] %v545
          %558 = vst [vmem:[%s259 + $0x10] sm:$0xff] %v550
          %559 = vst [vmem:[%s259 + $0x18] sm:$0xff] %v553
        $region56: #{tpu_custom_call.1} parent=43 // pred_fallthru
          _
        %s560 = sand.u32 %s173, 1
        %s561 = scalar_lea.sflag [#allocation7], %s560
        %s562 = sand.u32 %s173, 1
        %s563 = smul.addr %s562, 32
        %s564 = scalar_lea.vmem [#allocation6], %s563
        // Predicated region
        $region61: #{tpu_custom_call.1} parent=43 // pred_check
          %p565 = pneg %p183
        $region62: #{tpu_custom_call.1} parent=43 // pred_check_branch
          %567 = sbr.rel (%p565) target = $region64
        $region63: #{tpu_custom_call.1} parent=43 // pred_region
          %s568 = smul.u32 %s24, %s25
          %s569 = smul.u32 4, %s568
          %s571 = ssub.s32 512, 512
          %572 = vsyncadd %s561, %s571
          %s573 = smul.addr %s569, 128
          %s574 = scalar_lea.hbm %s6, %s573
          %s575 = sshll.u32 %s564, 4
          %s576 = int_to_ptr.vmem [resolvable:$true] %s575
          %581 = dma.vmem_to_hbm [thread:$0]  %s576, 512, %s574, %s561, 128, 128, 8
        $region64: #{tpu_custom_call.1} parent=43 // pred_fallthru
          _
      $region44: #{tpu_custom_call.1} parent=5 // pred_fallthru
        _
      %p582 = scmp.le.s32.totalorder 2, %s15
      // Predicated region
      $region65: #{tpu_custom_call.1} parent=5 // pred_check
        %p583 = pneg %p582
      $region66: #{tpu_custom_call.1} parent=5 // pred_check_branch
        %585 = sbr.rel (%p583) target = $region68
      $region67: #{tpu_custom_call.1} parent=5 // pred_region
        %s586 = ssub.s32 %s15, 2
        // Predicated region
        $region69: #{tpu_custom_call.1} parent=67 // pred_check
          %p587 = pneg %p189
        $region70: #{tpu_custom_call.1} parent=67 // pred_check_branch
          %589 = sbr.rel (%p587) target = $region72
        $region71: #{tpu_custom_call.1} parent=67 // pred_region
          %s590 = sand.u32 %s174, 1
          %s591 = scalar_lea.sflag [#allocation7], %s590
          %s592 = sand.u32 %s174, 1
          %s593 = smul.addr %s592, 32
          %s594 = scalar_lea.vmem [#allocation6], %s593
          %595 = dma.done %s591, 512
        $region72: #{tpu_custom_call.1} parent=67 // pred_fallthru
          _
      $region68: #{tpu_custom_call.1} parent=5 // pred_fallthru
        _
    $region6: #{tpu_custom_call.1} parent=1 // loop_footer
      %s19 = sadd.s32 1, %s15
    $region7: #{tpu_custom_call.1} parent=1 // loop_footer_branch
      %14 = sbr.rel target = $region3
    $region8: #{tpu_custom_call.1} parent=1 // loop_exit
      _
    %596 = vsyncpa [#allocation7], 1
    %s597 = scalar_lea.sflag [#allocation7], 1
    %598 = vsyncpa %s597, 1

</llo_original>
